<compile_context>
chip_gen: v5e
topology: v5e:2x2
jax: 0.10.0
libtpu: 0.0.40
codegen_flags: <defaults>
</compile_context>

<pallas_src>
import jax
import jax.numpy as jnp
from jax.experimental import pallas as pl
from jax.experimental.pallas import tpu as pltpu

_MIB = 1024 * 1024


def _drop_path_kernel(mult_ref, x_ref, o_ref):
    # mult_ref: (tb, 1) float32, values in {0, 1/keep_prob}
    # x_ref / o_ref: (tb, tf) lane-dense tile of the flattened activations.
    o_ref[...] = (x_ref[...] * mult_ref[...]).astype(o_ref.dtype)


def _detect_chip():
    """Best-effort (VMEM capacity bytes, TensorCores per chip); safe fallbacks."""
    vmem_bytes = None
    num_cores = 1
    try:
        info = pltpu.get_tpu_info()
        vmem_bytes = getattr(info, "vmem_capacity_bytes", None)
    except Exception:
        pass
    try:
        kind = jax.devices()[0].device_kind.lower()
        if ("v7" in kind) or ("tpu7" in kind) or ("7x" in kind):
            num_cores = 2          # v7x: 2 TensorCores / chip
    except Exception:
        pass
    if vmem_bytes is None or not isinstance(vmem_bytes, int):
        vmem_bytes = 64 * _MIB if num_cores == 2 else 128 * _MIB
    return vmem_bytes, num_cores


def _pick_tile(total, align, cap_elems):
    """Largest tile <= cap_elems that is a multiple of `align`; the full extent
    when the whole dim fits (full-extent blocks are always legal)."""
    if total <= cap_elems:
        return total
    cap = max(align, cap_elems)
    return max(align, (cap // align) * align)


def _auto_block(B, F, itemsize, target_bytes, num_cores, vmem_limit_bytes):
    # Sublane packing: f32 -> 8 rows/vreg, bf16/f16 -> 16, int8/fp8 -> 32.
    row_align = max(8, 32 // max(itemsize, 1))
    target_elems = max(row_align * 128, target_bytes // itemsize)

    if row_align * F <= target_elems:
        # Full lane-dense rows; fuse as many samples as fit the byte target.
        tf = F
        tb = _pick_tile(B, row_align, max(row_align, target_elems // max(F, 1)))
    else:
        # A single aligned row-block already exceeds the target: minimal row
        # tile, split columns into multiples of 128 lanes (ragged edge via cdiv).
        tb = min(B, row_align)
        tf = _pick_tile(F, 128, max(128, target_elems // max(tb, 1)))

    # Multi-TensorCore parts: give each core >= 2 parallel grid steps so the
    # grid is balanced and double buffering can overlap DMA. Single-core parts
    # skip this (splitting would only add per-step overhead).
    if num_cores > 1:
        min_steps = 2 * num_cores
        for _ in range(8):
            steps = pl.cdiv(B, tb) * pl.cdiv(F, tf)
            if steps >= min_steps:
                break
            if tb >= 2 * row_align:
                tb = max(row_align, ((tb // 2) // row_align) * row_align)
            elif tf >= 2 * 128:
                tf = max(128, ((tf // 2) // 128) * 128)
            else:
                break

    # Safety net: double-buffered in + out blocks (+ multiplier) must fit the
    # scoped VMEM limit with headroom for internal scratch.
    while (4 * tb * tf * itemsize + 4 * tb * 4) > max(_MIB, vmem_limit_bytes - 4 * _MIB):
        if tf >= 2 * 128:
            tf = max(128, ((tf // 2) // 128) * 128)
        elif tb >= 2 * row_align:
            tb = max(row_align, ((tb // 2) // row_align) * row_align)
        else:
            break
    return tb, tf


def drop_path_pallas(x, drop_prob, training, key, *, block_shape=None, donate=False):
    """JAX/Pallas equivalent of drop_path(x, drop_prob, training)."""
    if drop_prob == 0.0 or not training:
        return x
    if not (0.0 <= drop_prob < 1.0):
        raise ValueError("drop_prob must be in [0, 1) for the training path.")
    keep_prob = 1.0 - drop_prob

    orig_shape = x.shape
    B = x.shape[0]
    F = 1
    for d in x.shape[1:]:
        F *= d
    x2 = x.reshape(B, F)
    itemsize = jnp.dtype(x.dtype).itemsize

    # Per-sample multiplier, kept in float32 end to end; the cast to x.dtype
    # happens on the final product inside the kernel. One draw per sample,
    # exactly like torch.rand((B, 1, ..., 1)) in the reference.
    rand = jax.random.uniform(key, (B, 1), dtype=jnp.float32)
    kp = jnp.float32(keep_prob)
    mult = jnp.floor(kp + rand) / kp                      # (B, 1) f32, {0, 1/kp}

    vmem_capacity, num_cores = _detect_chip()
    vmem_limit = int(min(48 * _MIB, (vmem_capacity * 3) // 4))
    target_bytes = 8 * _MIB if num_cores > 1 else 4 * _MIB

    if block_shape is None:
        tb, tf = _auto_block(B, F, itemsize, target_bytes, num_cores, vmem_limit)
    else:
        tb, tf = block_shape

    grid = (pl.cdiv(B, tb), pl.cdiv(F, tf))

    out2 = pl.pallas_call(
        _drop_path_kernel,
        out_shape=jax.ShapeDtypeStruct((B, F), x.dtype),
        grid=grid,
        in_specs=[
            pl.BlockSpec((tb, 1), lambda i, j: (i, 0)),    # per-sample multiplier
            pl.BlockSpec((tb, tf), lambda i, j: (i, j)),   # activations
        ],
        out_specs=pl.BlockSpec((tb, tf), lambda i, j: (i, j)),
        compiler_params=pltpu.CompilerParams(
            dimension_semantics=("parallel", "parallel"),
            vmem_limit_bytes=vmem_limit,
        ),
        cost_estimate=pl.CostEstimate(
            flops=B * F,
            transcendentals=0,
            bytes_accessed=2 * B * F * itemsize + B * 4,
        ),
        # In-place over x only saves an allocation when the caller actually
        # donates x under jit; it does not reduce HBM traffic.
        input_output_aliases=({1: 0} if donate else {}),
    )(mult, x2)

    # TODO(synk): optional further win — prefetch a (B,) keep mask with
    # PrefetchScalarGridSpec and skip the x DMA (write zeros) for row blocks
    # whose samples are all dropped; saves ~drop_prob of all HBM reads.

    return out2.reshape(orig_shape)


def drop_path_reference(x, drop_prob, training, key):
    """Pure-JAX reference mirroring the PyTorch implementation.

    The Bernoulli draw is done in float32 so it uses the same RNG stream as
    the kernel; the scaling math is f32 then cast, matching the kernel's
    full-width product."""
    if drop_prob == 0.0 or not training:
        return x
    keep_prob = 1.0 - drop_prob
    shape = (x.shape[0],) + (1,) * (x.ndim - 1)
    random_tensor = jnp.floor(keep_prob + jax.random.uniform(key, shape, dtype=jnp.float32))
    return ((x.astype(jnp.float32) / jnp.float32(keep_prob)) * random_tensor).astype(x.dtype)


class DropPath:
    """Drop paths (Stochastic Depth) per sample."""

    def __init__(self, drop_prob=None):
        self.drop_prob = 0.0 if drop_prob is None else drop_prob
        self.training = True  # mirror nn.Module default train() behaviour

    def __call__(self, x, key):
        return drop_path_pallas(x, self.drop_prob, self.training, key)


if __name__ == "__main__":
    key = jax.random.PRNGKey(0)
    k_x, k_mask = jax.random.split(key)

    # Small ViT-like activation: batch=2, seq=8, hidden=32.
    x = jax.random.normal(k_x, (2, 8, 32), dtype=jnp.float32)

    module = DropPath(drop_prob=0.5)

    # Training path (stochastic depth active), auto-picked tiles.
    out_train = jax.block_until_ready(module(x, k_mask))
    ref_train = drop_path_reference(x, 0.5, True, k_mask)
    assert out_train.shape == x.shape and out_train.dtype == x.dtype
    assert jnp.allclose(out_train, ref_train, atol=1e-6, rtol=1e-6)

    # Explicit tile override exercising a multi-block grid -> same result.
    out_tiled = jax.block_until_ready(
        drop_path_pallas(x, 0.5, True, k_mask, block_shape=(2, 128)))
    assert jnp.allclose(out_tiled, ref_train, atol=1e-6, rtol=1e-6)

    # Ragged cdiv tiling: B=20 rows with an (8, 128) block -> masked edge blocks.
    x2 = jax.random.normal(k_x, (20, 12, 32), dtype=jnp.float32)
    ref2 = drop_path_reference(x2, 0.25, True, k_mask)
    out2_auto = jax.block_until_ready(drop_path_pallas(x2, 0.25, True, k_mask))
    out2_ragged = jax.block_until_ready(
        drop_path_pallas(x2, 0.25, True, k_mask, block_shape=(8, 128)))
    assert jnp.allclose(out2_auto, ref2, atol=1e-6, rtol=1e-5)
    assert jnp.allclose(out2_ragged, ref2, atol=1e-6, rtol=1e-5)

    # bf16 path: multiplier stays f32; cast happens on the in-kernel product.
    x3 = jax.random.normal(k_x, (16, 8, 32), dtype=jnp.bfloat16)
    out3 = jax.block_until_ready(drop_path_pallas(x3, 0.5, True, k_mask))
    ref3 = drop_path_reference(x3, 0.5, True, k_mask)
    assert out3.dtype == jnp.bfloat16
    assert jnp.allclose(out3.astype(jnp.float32), ref3.astype(jnp.float32),
                        atol=2e-2, rtol=2e-2)

    # Eval path (identity).
    module.training = False
    out_eval = jax.block_until_ready(module(x, k_mask))
    assert jnp.array_equal(out_eval, x)

    print("KERNEL_OK")
</pallas_src>

<mosaic_0001>
module attributes {stable_mosaic.version = 11 : i64} {
  func.func @_drop_path_kernel(%arg0: i32, %arg1: i32, %arg2: memref<2x1xf32, #tpu.memory_space<vmem>>, %arg3: memref<2x256xf32, #tpu.memory_space<vmem>>, %arg4: memref<2x256xf32, #tpu.memory_space<vmem>>) attributes {dimension_semantics = [#tpu.dimension_semantics<parallel>, #tpu.dimension_semantics<parallel>], iteration_bounds = array<i64: 1, 1>, scalar_prefetch = 0 : i64, scratch_operands = 0 : i64, tpu.core_type = #tpu.core_type<tc>, window_params = [{transform_indices = @transform_0, window_bounds = array<i64: 2, 1>}, {transform_indices = @transform_1, window_bounds = array<i64: 2, 256>}, {transform_indices = @transform_2, window_bounds = array<i64: 2, 256>}]} {
    %c0 = arith.constant 0 : index
    %c0_0 = arith.constant 0 : index
    %0 = vector.load %arg3[%c0, %c0_0] : memref<2x256xf32, #tpu.memory_space<vmem>>, vector<2x256xf32>
    %c0_1 = arith.constant 0 : index
    %c0_2 = arith.constant 0 : index
    %1 = vector.load %arg2[%c0_1, %c0_2] : memref<2x1xf32, #tpu.memory_space<vmem>>, vector<2x1xf32>
    %2 = vector.broadcast %1 : vector<2x1xf32> to vector<2x256xf32>
    %3 = arith.mulf %0, %2 : vector<2x256xf32>
    %c0_3 = arith.constant 0 : index
    %c0_4 = arith.constant 0 : index
    %4 = vector.load %arg4[%c0_3, %c0_4] : memref<2x256xf32, #tpu.memory_space<vmem>>, vector<2x256xf32>
    tpu.vector_store %arg4[%c0_3, %c0_4], %3 {strides = array<i32>} : memref<2x256xf32, #tpu.memory_space<vmem>>, vector<2x256xf32>,
    return
  }
  func.func @transform_0(%arg0: i32, %arg1: i32) -> (i32, i32) {
    %c0_i32 = arith.constant 0 : i32
    %c0_i32_0 = arith.constant 0 : i32
    return %arg0, %c0_i32 : i32, i32
  }
  func.func @transform_1(%arg0: i32, %arg1: i32) -> (i32, i32) {
    %c0_i32 = arith.constant 0 : i32
    return %arg0, %arg1 : i32, i32
  }
  func.func @transform_2(%arg0: i32, %arg1: i32) -> (i32, i32) {
    %c0_i32 = arith.constant 0 : i32
    return %arg0, %arg1 : i32, i32
  }
}

</mosaic_0001>

<llo_original>
// kernel: tpu_custom_call.1
$region0: #{tpu_custom_call.1}
  #allocation0 [shape = 'u32[]', space=smem, size = 0x4, offset = 0x4, fixed_abs, tag = 'smem constant byte address 0x4 - core index']
  #allocation1 [shape = 'u32[72,128]{1,0:T(1,128)}', space=vmem, size = 0x9000, scoped, tag = 'internal scratch']
  %s0 = inlined_call_operand.vmem [shape: f32[2,1], index: 0, kind: input, shape index: {}]
  %s1 = inlined_call_operand.hbm [shape: f32[2,256], index: 1, kind: input, shape index: {}]
  %s2 = inlined_call_operand.hbm [shape: f32[2,256], index: 2, kind: output, shape index: {}]
  %s3 = sld [smem:[#allocation0]]
  $region22: #{tpu_custom_call.1} parent=0
    _
  %s5 = ssub.s32 1, %s3
  %s6 = scalar_select 0, %s5, %s3
  $region1: #{tpu_custom_call.1} parent=0
    #allocation2 [shape = 'u8[2048]{0}', space=vmem, size = 0x800, scoped, tag = 'input window, operand 1, single buffered']
    #allocation3 [shape = 's32[1]{0}', space=sflag, size = 0x4, scoped, tag = 'scoped memory for tpu_custom_call.1']
    #allocation4 [shape = 's32[1]{0}', space=sflag, size = 0x4, scoped, tag = 'scoped memory for tpu_custom_call.1']
    #allocation5 [shape = 'u8[2048]{0}', space=vmem, size = 0x800, scoped, tag = 'output window, operand 0, single buffered']
    %7 = vsyncpa [#allocation3], 0
    %8 = vsyncpa [#allocation4], 0
    // Predicated region
    $region2: #{tpu_custom_call.1} parent=1 // pred_check
      _
    $region3: #{tpu_custom_call.1} parent=1 // pred_check_branch
      %10 = sbr.rel (0) target = $region5
    $region4: #{tpu_custom_call.1} parent=1 // pred_region
      _
    $region5: #{tpu_custom_call.1} parent=1 // pred_fallthru
      _
    // Predicated region
    $region6: #{tpu_custom_call.1} parent=1 // pred_check
      _
    $region7: #{tpu_custom_call.1} parent=1 // pred_check_branch
      %12 = sbr.rel (0) target = $region9
    $region8: #{tpu_custom_call.1} parent=1 // pred_region
      %14 = vsyncadd [#allocation3], 0
      %s16 = sshll.u32 %s1, 4
      %s17 = int_to_ptr.hbm [resolvable:$true] %s16
      %s18 = sshll.u32 [#allocation2], 4
      %s19 = int_to_ptr.vmem [resolvable:$true] %s18
      %21 = dma.hbm_to_vmem [thread:$0]  %s17, 64, %s19, [#allocation3]
    $region9: #{tpu_custom_call.1} parent=1 // pred_fallthru
      _
    // Predicated region
    $region10: #{tpu_custom_call.1} parent=1 // pred_check
      _
    $region11: #{tpu_custom_call.1} parent=1 // pred_check_branch
      %23 = sbr.rel (0) target = $region13
    $region12: #{tpu_custom_call.1} parent=1 // pred_region
      %25 = dma.done [#allocation3], 64
    $region13: #{tpu_custom_call.1} parent=1 // pred_fallthru
      _
    %v26 = vld [vmem:[#allocation2] sm:$0xf]
    %v27 = vld [vmem:[%s0] sm:$0x3]
    %29 = vset.pattern.permute.xlu0 0
    %30 = vperm.xlu0 %29, %v27
    %v31 = vpop.permute.xlu0 %30
    %v33 = vunpack.c.l.s4 269488144
    %v34 = vunpack.c.0.s8 %v33
    %v35 = vperm.slane %v31, %v34
    %v37 = vmul.f32 %v26, %v35
    %38 = vst [vmem:[#allocation5] sm:$0xf] %v37
    // Predicated region
    $region14: #{tpu_custom_call.1} parent=1 // pred_check
      _
    $region15: #{tpu_custom_call.1} parent=1 // pred_check_branch
      %40 = sbr.rel (0) target = $region17
    $region16: #{tpu_custom_call.1} parent=1 // pred_region
      %42 = vsyncadd [#allocation4], 0
      %s44 = sshll.u32 [#allocation5], 4
      %s45 = int_to_ptr.vmem [resolvable:$true] %s44
      %s46 = sshll.u32 %s2, 4
      %s47 = int_to_ptr.hbm [resolvable:$true] %s46
      %49 = dma.vmem_to_hbm [thread:$0]  %s45, 64, %s47, [#allocation4]
    $region17: #{tpu_custom_call.1} parent=1 // pred_fallthru
      _
    // Predicated region
    $region18: #{tpu_custom_call.1} parent=1 // pred_check
      _
    $region19: #{tpu_custom_call.1} parent=1 // pred_check_branch
      %51 = sbr.rel (0) target = $region21
    $region20: #{tpu_custom_call.1} parent=1 // pred_region
      %53 = dma.done [#allocation4], 64
    $region21: #{tpu_custom_call.1} parent=1 // pred_fallthru
      _
    %54 = vsyncpa [#allocation3], 1
    %55 = vsyncpa [#allocation4], 1

</llo_original>
